<compile_context>
chip_gen: v7x
topology: tpu7x:2x2x1
jax: 0.10.0
libtpu: 0.0.40
codegen_flags: <defaults>
</compile_context>

<pallas_src>
import math
from itertools import combinations, permutations

import jax
import jax.numpy as jnp
from jax import lax
from jax.experimental import pallas as pl
from jax.experimental.pallas import tpu as pltpu

_PI = math.pi
_INV_PI = 1.0 / math.pi

_LANES = 128
_SUBLANES = 8
_MAX_TILE_ROWS = 512          # up to 512 * 128 = 65536 batch elements per grid step


def _wrap_error(diff):
    # torch: (diff + pi/2) % pi - pi/2  ==  diff - pi * floor(diff/pi + 0.5)
    # Divide-free form: mul, add, floor, mul, sub -- pure VPU, no EUP recip.
    # (Only exact half-period boundaries can flip the wrapped sign vs. the
    #  mod form; the squared error is identical there.)
    return diff - _PI * jnp.floor(diff * _INV_PI + 0.5)


def _chunk_rows(m):
    # Rows per register-resident chunk.  Each (8,128) f32 slab is one vreg;
    # budget ~= m^2 (e2 table) + 2m (inputs) + DP frontier + accumulator,
    # kept well under the 64-vreg file.
    if m >= 4:
        return 8
    if m == 3:
        return 16
    return 32


def _round_up(x, n):
    return -(-x // n) * n


def _make_pmse_kernel(m, tile_rows, chunk):
    n_chunks = tile_rows // chunk

    def kernel(x_ref, out_ref):
        # x_ref:   (2, m, tile_rows, 128) f32; x_ref[0] = preds, x_ref[1] = DOA
        #          (batch laid out on sublanes x lanes -> full-width VPU work).
        # out_ref: (1, 1) SMEM -- per-tile partial sum of min_P ||err||^2.
        def chunk_body(c, acc):
            r0 = pl.multiple_of(c * chunk, chunk)
            preds = [x_ref[0, i, pl.ds(r0, chunk), :] for i in range(m)]
            doa = [x_ref[1, j, pl.ds(r0, chunk), :] for j in range(m)]

            # Pairwise wrapped squared errors e2[i][j] = wrap(pred_i - doa_j)^2,
            # computed once (m*m full-vreg elementwise slabs) and shared by
            # every permutation via the subset DP below.
            e2 = [[None] * m for _ in range(m)]
            for i in range(m):
                for j in range(m):
                    w = _wrap_error(preds[i] - doa[j])
                    e2[i][j] = w * w

            # Assignment-problem subset DP (min over the m! permutations using
            # m * 2^(m-1) add+min pairs instead of ~m*m! VALU ops):
            #   f[S] = min_{i in S} f[S \ {i}] + e2[i][|S| - 1]
            prev = {0: None}                       # None == exact zero
            for size in range(1, m + 1):
                cur = {}
                j = size - 1                       # target column being assigned
                for subset in combinations(range(m), size):
                    mask = 0
                    for i in subset:
                        mask |= 1 << i
                    best = None
                    for i in subset:
                        p = prev[mask ^ (1 << i)]
                        cand = e2[i][j] if p is None else p + e2[i][j]
                        best = cand if best is None else jnp.minimum(best, cand)
                    cur[mask] = best
                prev = cur
            min_sq = prev[(1 << m) - 1]            # (chunk, 128)

            return acc + min_sq

        acc0 = jnp.zeros((chunk, _LANES), jnp.float32)
        acc = lax.fori_loop(0, n_chunks, chunk_body, acc0)

        # Single cross-lane/sublane reduction per tile; 1/M scaling outside.
        out_ref[0, 0] = jnp.sum(acc)

    return kernel


def pmse_loss(preds, DOA):
    """Permutation-invariant MSE loss. preds, DOA: (B, M) -> scalar."""
    preds = preds.astype(jnp.float32)
    DOA = DOA.astype(jnp.float32)
    B, M = preds.shape
    chunk = _chunk_rows(M)

    # Map batch onto (rows, 128) vreg-shaped slabs; rows padded to the chunk
    # size so the in-kernel fori_loop sees whole chunks.  Zero padding is
    # safe: wrap(0) == 0, so padded slots contribute 0 to every permutation.
    rows = max(1, -(-B // _LANES))
    rows_c = _round_up(rows, chunk)
    # Prefer >= 2 grid tiles (shards the "parallel" axis across v7x's two
    # TensorCores) while capping tile size; the double-buffered working set
    # (2 * 2*M*tile_rows*128*4 B <= 4 MiB at M=4) fits every generation's
    # scoped-VMEM default, so no vmem_limit_bytes override is needed.
    tile_rows = min(_MAX_TILE_ROWS,
                    max(chunk, _round_up(-(-rows_c // 2), chunk)))
    rows_pad = _round_up(rows_c, tile_rows)
    n_tiles = rows_pad // tile_rows
    b_pad = rows_pad * _LANES

    # One transpose/pad/reshape over the stacked (preds, DOA) pair.
    x = jnp.stack([preds, DOA], axis=0)                  # (2, B, M)
    x = jnp.transpose(x, (0, 2, 1))                      # (2, M, B)
    x = jnp.pad(x, ((0, 0), (0, 0), (0, b_pad - B)))     # zero-pad batch
    x = x.reshape(2, M, rows_pad, _LANES)                # (2, M, rows_pad, 128)

    kernel = _make_pmse_kernel(M, tile_rows, chunk)
    partials = pl.pallas_call(
        kernel,
        out_shape=jax.ShapeDtypeStruct((n_tiles, 1), jnp.float32),
        grid=(n_tiles,),
        in_specs=[
            pl.BlockSpec((2, M, tile_rows, _LANES), lambda i: (0, 0, i, 0)),
        ],
        out_specs=pl.BlockSpec((1, 1), lambda i: (i, 0),
                               memory_space=pltpu.MemorySpace.SMEM),
        compiler_params=pltpu.CompilerParams(
            dimension_semantics=("parallel",)),
    )(x)

    # min(x / M) == min(x) / M because 1/M > 0, so one final scale is exact.
    return jnp.sum(partials) * (1.0 / M)


def _pmse_reference(preds, DOA):
    # Pure-JAX reference mirroring the torch module exactly (floor-mod wrap,
    # explicit min over all M! permutations).
    B, M = preds.shape
    perm_idx = jnp.asarray(list(permutations(range(M))), dtype=jnp.int32)
    perm_preds = preds[:, perm_idx]                      # (B, P, M)
    err = jnp.remainder(perm_preds - DOA[:, None, :] + _PI / 2.0, _PI) - _PI / 2.0
    sq = jnp.sum(err ** 2, axis=-1) / M
    return jnp.sum(jnp.min(sq, axis=-1))


if __name__ == "__main__":
    key = jax.random.PRNGKey(0)
    k1, k2, k3, k4 = jax.random.split(key, 4)

    # Small case matching the module's typical use (B batch rows of M DOAs).
    B, M = 2, 4                                          # P = 4! = 24
    preds = jax.random.uniform(k1, (B, M), jnp.float32, minval=-_PI, maxval=_PI)
    DOA = jax.random.uniform(k2, (B, M), jnp.float32, minval=-_PI, maxval=_PI)
    out = jax.block_until_ready(pmse_loss(preds, DOA))
    ref = _pmse_reference(preds, DOA)
    assert jnp.allclose(out, ref, rtol=1e-5, atol=1e-5), (out, ref)

    # Larger batch to exercise multi-tile grid + in-kernel chunk loop + padding.
    B2, M2 = 9000, 3                                     # 2 grid tiles, 3 chunks each
    preds2 = jax.random.uniform(k3, (B2, M2), jnp.float32, minval=-_PI, maxval=_PI)
    DOA2 = jax.random.uniform(k4, (B2, M2), jnp.float32, minval=-_PI, maxval=_PI)
    out2 = jax.block_until_ready(pmse_loss(preds2, DOA2))
    ref2 = _pmse_reference(preds2, DOA2)
    assert jnp.allclose(out2, ref2, rtol=1e-4, atol=1e-4), (out2, ref2)

    print("KERNEL_OK")
</pallas_src>

<mosaic_0001>
module attributes {stable_mosaic.version = 11 : i64} {
  func.func @kernel(%arg0: i32, %arg1: memref<2x4x8x128xf32, #tpu.memory_space<vmem>>, %arg2: memref<1x1xf32, #tpu.memory_space<smem>>) attributes {dimension_semantics = [#tpu.dimension_semantics<parallel>], iteration_bounds = array<i64: 1>, scalar_prefetch = 0 : i64, scratch_operands = 0 : i64, tpu.core_type = #tpu.core_type<tc>, window_params = [{transform_indices = @transform_0, window_bounds = array<i64: 2, 4, 8, 128>}, {transform_indices = @transform_1, window_bounds = array<i64: 1, 1>}]} {
    %cst = arith.constant 0.000000e+00 : f32
    %0 = vector.broadcast %cst : f32 to vector<8x128xf32>
    %c0_i32 = arith.constant 0 : i32
    %c8_i32 = arith.constant 8 : i32
    %1 = arith.muli %c0_i32, %c8_i32 : i32
    %2 = tpu.assume_multiple %1, 8 : i32
    %c0 = arith.constant 0 : index
    %c0_0 = arith.constant 0 : index
    %3 = arith.index_cast %2 : i32 to index
    %c0_1 = arith.constant 0 : index
    %4 = vector.load %arg1[%c0, %c0_0, %3, %c0_1] : memref<2x4x8x128xf32, #tpu.memory_space<vmem>>, vector<1x1x8x128xf32>
    %5 = vector.shape_cast %4 : vector<1x1x8x128xf32> to vector<8x128xf32>
    %c0_2 = arith.constant 0 : index
    %c1 = arith.constant 1 : index
    %6 = arith.index_cast %2 : i32 to index
    %c0_3 = arith.constant 0 : index
    %7 = vector.load %arg1[%c0_2, %c1, %6, %c0_3] : memref<2x4x8x128xf32, #tpu.memory_space<vmem>>, vector<1x1x8x128xf32>
    %8 = vector.shape_cast %7 : vector<1x1x8x128xf32> to vector<8x128xf32>
    %c0_4 = arith.constant 0 : index
    %c2 = arith.constant 2 : index
    %9 = arith.index_cast %2 : i32 to index
    %c0_5 = arith.constant 0 : index
    %10 = vector.load %arg1[%c0_4, %c2, %9, %c0_5] : memref<2x4x8x128xf32, #tpu.memory_space<vmem>>, vector<1x1x8x128xf32>
    %11 = vector.shape_cast %10 : vector<1x1x8x128xf32> to vector<8x128xf32>
    %c0_6 = arith.constant 0 : index
    %c3 = arith.constant 3 : index
    %12 = arith.index_cast %2 : i32 to index
    %c0_7 = arith.constant 0 : index
    %13 = vector.load %arg1[%c0_6, %c3, %12, %c0_7] : memref<2x4x8x128xf32, #tpu.memory_space<vmem>>, vector<1x1x8x128xf32>
    %14 = vector.shape_cast %13 : vector<1x1x8x128xf32> to vector<8x128xf32>
    %c1_8 = arith.constant 1 : index
    %c0_9 = arith.constant 0 : index
    %15 = arith.index_cast %2 : i32 to index
    %c0_10 = arith.constant 0 : index
    %16 = vector.load %arg1[%c1_8, %c0_9, %15, %c0_10] : memref<2x4x8x128xf32, #tpu.memory_space<vmem>>, vector<1x1x8x128xf32>
    %17 = vector.shape_cast %16 : vector<1x1x8x128xf32> to vector<8x128xf32>
    %c1_11 = arith.constant 1 : index
    %c1_12 = arith.constant 1 : index
    %18 = arith.index_cast %2 : i32 to index
    %c0_13 = arith.constant 0 : index
    %19 = vector.load %arg1[%c1_11, %c1_12, %18, %c0_13] : memref<2x4x8x128xf32, #tpu.memory_space<vmem>>, vector<1x1x8x128xf32>
    %20 = vector.shape_cast %19 : vector<1x1x8x128xf32> to vector<8x128xf32>
    %c1_14 = arith.constant 1 : index
    %c2_15 = arith.constant 2 : index
    %21 = arith.index_cast %2 : i32 to index
    %c0_16 = arith.constant 0 : index
    %22 = vector.load %arg1[%c1_14, %c2_15, %21, %c0_16] : memref<2x4x8x128xf32, #tpu.memory_space<vmem>>, vector<1x1x8x128xf32>
    %23 = vector.shape_cast %22 : vector<1x1x8x128xf32> to vector<8x128xf32>
    %c1_17 = arith.constant 1 : index
    %c3_18 = arith.constant 3 : index
    %24 = arith.index_cast %2 : i32 to index
    %c0_19 = arith.constant 0 : index
    %25 = vector.load %arg1[%c1_17, %c3_18, %24, %c0_19] : memref<2x4x8x128xf32, #tpu.memory_space<vmem>>, vector<1x1x8x128xf32>
    %26 = vector.shape_cast %25 : vector<1x1x8x128xf32> to vector<8x128xf32>
    %27 = arith.subf %5, %17 : vector<8x128xf32>
    %cst_20 = arith.constant 0.318309873 : f32
    %28 = vector.broadcast %cst_20 : f32 to vector<8x128xf32>
    %29 = arith.mulf %27, %28 : vector<8x128xf32>
    %cst_21 = arith.constant 5.000000e-01 : f32
    %30 = vector.broadcast %cst_21 : f32 to vector<8x128xf32>
    %31 = arith.addf %29, %30 : vector<8x128xf32>
    %32 = math.floor %31 : vector<8x128xf32>
    %cst_22 = arith.constant 3.14159274 : f32
    %33 = vector.broadcast %cst_22 : f32 to vector<8x128xf32>
    %34 = arith.mulf %33, %32 : vector<8x128xf32>
    %35 = arith.subf %27, %34 : vector<8x128xf32>
    %36 = arith.mulf %35, %35 : vector<8x128xf32>
    %37 = arith.subf %5, %20 : vector<8x128xf32>
    %cst_23 = arith.constant 0.318309873 : f32
    %38 = vector.broadcast %cst_23 : f32 to vector<8x128xf32>
    %39 = arith.mulf %37, %38 : vector<8x128xf32>
    %cst_24 = arith.constant 5.000000e-01 : f32
    %40 = vector.broadcast %cst_24 : f32 to vector<8x128xf32>
    %41 = arith.addf %39, %40 : vector<8x128xf32>
    %42 = math.floor %41 : vector<8x128xf32>
    %cst_25 = arith.constant 3.14159274 : f32
    %43 = vector.broadcast %cst_25 : f32 to vector<8x128xf32>
    %44 = arith.mulf %43, %42 : vector<8x128xf32>
    %45 = arith.subf %37, %44 : vector<8x128xf32>
    %46 = arith.mulf %45, %45 : vector<8x128xf32>
    %47 = arith.subf %5, %23 : vector<8x128xf32>
    %cst_26 = arith.constant 0.318309873 : f32
    %48 = vector.broadcast %cst_26 : f32 to vector<8x128xf32>
    %49 = arith.mulf %47, %48 : vector<8x128xf32>
    %cst_27 = arith.constant 5.000000e-01 : f32
    %50 = vector.broadcast %cst_27 : f32 to vector<8x128xf32>
    %51 = arith.addf %49, %50 : vector<8x128xf32>
    %52 = math.floor %51 : vector<8x128xf32>
    %cst_28 = arith.constant 3.14159274 : f32
    %53 = vector.broadcast %cst_28 : f32 to vector<8x128xf32>
    %54 = arith.mulf %53, %52 : vector<8x128xf32>
    %55 = arith.subf %47, %54 : vector<8x128xf32>
    %56 = arith.mulf %55, %55 : vector<8x128xf32>
    %57 = arith.subf %5, %26 : vector<8x128xf32>
    %cst_29 = arith.constant 0.318309873 : f32
    %58 = vector.broadcast %cst_29 : f32 to vector<8x128xf32>
    %59 = arith.mulf %57, %58 : vector<8x128xf32>
    %cst_30 = arith.constant 5.000000e-01 : f32
    %60 = vector.broadcast %cst_30 : f32 to vector<8x128xf32>
    %61 = arith.addf %59, %60 : vector<8x128xf32>
    %62 = math.floor %61 : vector<8x128xf32>
    %cst_31 = arith.constant 3.14159274 : f32
    %63 = vector.broadcast %cst_31 : f32 to vector<8x128xf32>
    %64 = arith.mulf %63, %62 : vector<8x128xf32>
    %65 = arith.subf %57, %64 : vector<8x128xf32>
    %66 = arith.mulf %65, %65 : vector<8x128xf32>
    %67 = arith.subf %8, %17 : vector<8x128xf32>
    %cst_32 = arith.constant 0.318309873 : f32
    %68 = vector.broadcast %cst_32 : f32 to vector<8x128xf32>
    %69 = arith.mulf %67, %68 : vector<8x128xf32>
    %cst_33 = arith.constant 5.000000e-01 : f32
    %70 = vector.broadcast %cst_33 : f32 to vector<8x128xf32>
    %71 = arith.addf %69, %70 : vector<8x128xf32>
    %72 = math.floor %71 : vector<8x128xf32>
    %cst_34 = arith.constant 3.14159274 : f32
    %73 = vector.broadcast %cst_34 : f32 to vector<8x128xf32>
    %74 = arith.mulf %73, %72 : vector<8x128xf32>
    %75 = arith.subf %67, %74 : vector<8x128xf32>
    %76 = arith.mulf %75, %75 : vector<8x128xf32>
    %77 = arith.subf %8, %20 : vector<8x128xf32>
    %cst_35 = arith.constant 0.318309873 : f32
    %78 = vector.broadcast %cst_35 : f32 to vector<8x128xf32>
    %79 = arith.mulf %77, %78 : vector<8x128xf32>
    %cst_36 = arith.constant 5.000000e-01 : f32
    %80 = vector.broadcast %cst_36 : f32 to vector<8x128xf32>
    %81 = arith.addf %79, %80 : vector<8x128xf32>
    %82 = math.floor %81 : vector<8x128xf32>
    %cst_37 = arith.constant 3.14159274 : f32
    %83 = vector.broadcast %cst_37 : f32 to vector<8x128xf32>
    %84 = arith.mulf %83, %82 : vector<8x128xf32>
    %85 = arith.subf %77, %84 : vector<8x128xf32>
    %86 = arith.mulf %85, %85 : vector<8x128xf32>
    %87 = arith.subf %8, %23 : vector<8x128xf32>
    %cst_38 = arith.constant 0.318309873 : f32
    %88 = vector.broadcast %cst_38 : f32 to vector<8x128xf32>
    %89 = arith.mulf %87, %88 : vector<8x128xf32>
    %cst_39 = arith.constant 5.000000e-01 : f32
    %90 = vector.broadcast %cst_39 : f32 to vector<8x128xf32>
    %91 = arith.addf %89, %90 : vector<8x128xf32>
    %92 = math.floor %91 : vector<8x128xf32>
    %cst_40 = arith.constant 3.14159274 : f32
    %93 = vector.broadcast %cst_40 : f32 to vector<8x128xf32>
    %94 = arith.mulf %93, %92 : vector<8x128xf32>
    %95 = arith.subf %87, %94 : vector<8x128xf32>
    %96 = arith.mulf %95, %95 : vector<8x128xf32>
    %97 = arith.subf %8, %26 : vector<8x128xf32>
    %cst_41 = arith.constant 0.318309873 : f32
    %98 = vector.broadcast %cst_41 : f32 to vector<8x128xf32>
    %99 = arith.mulf %97, %98 : vector<8x128xf32>
    %cst_42 = arith.constant 5.000000e-01 : f32
    %100 = vector.broadcast %cst_42 : f32 to vector<8x128xf32>
    %101 = arith.addf %99, %100 : vector<8x128xf32>
    %102 = math.floor %101 : vector<8x128xf32>
    %cst_43 = arith.constant 3.14159274 : f32
    %103 = vector.broadcast %cst_43 : f32 to vector<8x128xf32>
    %104 = arith.mulf %103, %102 : vector<8x128xf32>
    %105 = arith.subf %97, %104 : vector<8x128xf32>
    %106 = arith.mulf %105, %105 : vector<8x128xf32>
    %107 = arith.subf %11, %17 : vector<8x128xf32>
    %cst_44 = arith.constant 0.318309873 : f32
    %108 = vector.broadcast %cst_44 : f32 to vector<8x128xf32>
    %109 = arith.mulf %107, %108 : vector<8x128xf32>
    %cst_45 = arith.constant 5.000000e-01 : f32
    %110 = vector.broadcast %cst_45 : f32 to vector<8x128xf32>
    %111 = arith.addf %109, %110 : vector<8x128xf32>
    %112 = math.floor %111 : vector<8x128xf32>
    %cst_46 = arith.constant 3.14159274 : f32
    %113 = vector.broadcast %cst_46 : f32 to vector<8x128xf32>
    %114 = arith.mulf %113, %112 : vector<8x128xf32>
    %115 = arith.subf %107, %114 : vector<8x128xf32>
    %116 = arith.mulf %115, %115 : vector<8x128xf32>
    %117 = arith.subf %11, %20 : vector<8x128xf32>
    %cst_47 = arith.constant 0.318309873 : f32
    %118 = vector.broadcast %cst_47 : f32 to vector<8x128xf32>
    %119 = arith.mulf %117, %118 : vector<8x128xf32>
    %cst_48 = arith.constant 5.000000e-01 : f32
    %120 = vector.broadcast %cst_48 : f32 to vector<8x128xf32>
    %121 = arith.addf %119, %120 : vector<8x128xf32>
    %122 = math.floor %121 : vector<8x128xf32>
    %cst_49 = arith.constant 3.14159274 : f32
    %123 = vector.broadcast %cst_49 : f32 to vector<8x128xf32>
    %124 = arith.mulf %123, %122 : vector<8x128xf32>
    %125 = arith.subf %117, %124 : vector<8x128xf32>
    %126 = arith.mulf %125, %125 : vector<8x128xf32>
    %127 = arith.subf %11, %23 : vector<8x128xf32>
    %cst_50 = arith.constant 0.318309873 : f32
    %128 = vector.broadcast %cst_50 : f32 to vector<8x128xf32>
    %129 = arith.mulf %127, %128 : vector<8x128xf32>
    %cst_51 = arith.constant 5.000000e-01 : f32
    %130 = vector.broadcast %cst_51 : f32 to vector<8x128xf32>
    %131 = arith.addf %129, %130 : vector<8x128xf32>
    %132 = math.floor %131 : vector<8x128xf32>
    %cst_52 = arith.constant 3.14159274 : f32
    %133 = vector.broadcast %cst_52 : f32 to vector<8x128xf32>
    %134 = arith.mulf %133, %132 : vector<8x128xf32>
    %135 = arith.subf %127, %134 : vector<8x128xf32>
    %136 = arith.mulf %135, %135 : vector<8x128xf32>
    %137 = arith.subf %11, %26 : vector<8x128xf32>
    %cst_53 = arith.constant 0.318309873 : f32
    %138 = vector.broadcast %cst_53 : f32 to vector<8x128xf32>
    %139 = arith.mulf %137, %138 : vector<8x128xf32>
    %cst_54 = arith.constant 5.000000e-01 : f32
    %140 = vector.broadcast %cst_54 : f32 to vector<8x128xf32>
    %141 = arith.addf %139, %140 : vector<8x128xf32>
    %142 = math.floor %141 : vector<8x128xf32>
    %cst_55 = arith.constant 3.14159274 : f32
    %143 = vector.broadcast %cst_55 : f32 to vector<8x128xf32>
    %144 = arith.mulf %143, %142 : vector<8x128xf32>
    %145 = arith.subf %137, %144 : vector<8x128xf32>
    %146 = arith.mulf %145, %145 : vector<8x128xf32>
    %147 = arith.subf %14, %17 : vector<8x128xf32>
    %cst_56 = arith.constant 0.318309873 : f32
    %148 = vector.broadcast %cst_56 : f32 to vector<8x128xf32>
    %149 = arith.mulf %147, %148 : vector<8x128xf32>
    %cst_57 = arith.constant 5.000000e-01 : f32
    %150 = vector.broadcast %cst_57 : f32 to vector<8x128xf32>
    %151 = arith.addf %149, %150 : vector<8x128xf32>
    %152 = math.floor %151 : vector<8x128xf32>
    %cst_58 = arith.constant 3.14159274 : f32
    %153 = vector.broadcast %cst_58 : f32 to vector<8x128xf32>
    %154 = arith.mulf %153, %152 : vector<8x128xf32>
    %155 = arith.subf %147, %154 : vector<8x128xf32>
    %156 = arith.mulf %155, %155 : vector<8x128xf32>
    %157 = arith.subf %14, %20 : vector<8x128xf32>
    %cst_59 = arith.constant 0.318309873 : f32
    %158 = vector.broadcast %cst_59 : f32 to vector<8x128xf32>
    %159 = arith.mulf %157, %158 : vector<8x128xf32>
    %cst_60 = arith.constant 5.000000e-01 : f32
    %160 = vector.broadcast %cst_60 : f32 to vector<8x128xf32>
    %161 = arith.addf %159, %160 : vector<8x128xf32>
    %162 = math.floor %161 : vector<8x128xf32>
    %cst_61 = arith.constant 3.14159274 : f32
    %163 = vector.broadcast %cst_61 : f32 to vector<8x128xf32>
    %164 = arith.mulf %163, %162 : vector<8x128xf32>
    %165 = arith.subf %157, %164 : vector<8x128xf32>
    %166 = arith.mulf %165, %165 : vector<8x128xf32>
    %167 = arith.subf %14, %23 : vector<8x128xf32>
    %cst_62 = arith.constant 0.318309873 : f32
    %168 = vector.broadcast %cst_62 : f32 to vector<8x128xf32>
    %169 = arith.mulf %167, %168 : vector<8x128xf32>
    %cst_63 = arith.constant 5.000000e-01 : f32
    %170 = vector.broadcast %cst_63 : f32 to vector<8x128xf32>
    %171 = arith.addf %169, %170 : vector<8x128xf32>
    %172 = math.floor %171 : vector<8x128xf32>
    %cst_64 = arith.constant 3.14159274 : f32
    %173 = vector.broadcast %cst_64 : f32 to vector<8x128xf32>
    %174 = arith.mulf %173, %172 : vector<8x128xf32>
    %175 = arith.subf %167, %174 : vector<8x128xf32>
    %176 = arith.mulf %175, %175 : vector<8x128xf32>
    %177 = arith.subf %14, %26 : vector<8x128xf32>
    %cst_65 = arith.constant 0.318309873 : f32
    %178 = vector.broadcast %cst_65 : f32 to vector<8x128xf32>
    %179 = arith.mulf %177, %178 : vector<8x128xf32>
    %cst_66 = arith.constant 5.000000e-01 : f32
    %180 = vector.broadcast %cst_66 : f32 to vector<8x128xf32>
    %181 = arith.addf %179, %180 : vector<8x128xf32>
    %182 = math.floor %181 : vector<8x128xf32>
    %cst_67 = arith.constant 3.14159274 : f32
    %183 = vector.broadcast %cst_67 : f32 to vector<8x128xf32>
    %184 = arith.mulf %183, %182 : vector<8x128xf32>
    %185 = arith.subf %177, %184 : vector<8x128xf32>
    %186 = arith.mulf %185, %185 : vector<8x128xf32>
    %187 = arith.addf %76, %46 : vector<8x128xf32>
    %188 = arith.addf %36, %86 : vector<8x128xf32>
    %189 = arith.minimumf %187, %188 : vector<8x128xf32>
    %190 = arith.addf %116, %46 : vector<8x128xf32>
    %191 = arith.addf %36, %126 : vector<8x128xf32>
    %192 = arith.minimumf %190, %191 : vector<8x128xf32>
    %193 = arith.addf %156, %46 : vector<8x128xf32>
    %194 = arith.addf %36, %166 : vector<8x128xf32>
    %195 = arith.minimumf %193, %194 : vector<8x128xf32>
    %196 = arith.addf %116, %86 : vector<8x128xf32>
    %197 = arith.addf %76, %126 : vector<8x128xf32>
    %198 = arith.minimumf %196, %197 : vector<8x128xf32>
    %199 = arith.addf %156, %86 : vector<8x128xf32>
    %200 = arith.addf %76, %166 : vector<8x128xf32>
    %201 = arith.minimumf %199, %200 : vector<8x128xf32>
    %202 = arith.addf %156, %126 : vector<8x128xf32>
    %203 = arith.addf %116, %166 : vector<8x128xf32>
    %204 = arith.minimumf %202, %203 : vector<8x128xf32>
    %205 = arith.addf %198, %56 : vector<8x128xf32>
    %206 = arith.addf %192, %96 : vector<8x128xf32>
    %207 = arith.minimumf %205, %206 : vector<8x128xf32>
    %208 = arith.addf %189, %136 : vector<8x128xf32>
    %209 = arith.minimumf %207, %208 : vector<8x128xf32>
    %210 = arith.addf %201, %56 : vector<8x128xf32>
    %211 = arith.addf %195, %96 : vector<8x128xf32>
    %212 = arith.minimumf %210, %211 : vector<8x128xf32>
    %213 = arith.addf %189, %176 : vector<8x128xf32>
    %214 = arith.minimumf %212, %213 : vector<8x128xf32>
    %215 = arith.addf %204, %56 : vector<8x128xf32>
    %216 = arith.addf %195, %136 : vector<8x128xf32>
    %217 = arith.minimumf %215, %216 : vector<8x128xf32>
    %218 = arith.addf %192, %176 : vector<8x128xf32>
    %219 = arith.minimumf %217, %218 : vector<8x128xf32>
    %220 = arith.addf %204, %96 : vector<8x128xf32>
    %221 = arith.addf %201, %136 : vector<8x128xf32>
    %222 = arith.minimumf %220, %221 : vector<8x128xf32>
    %223 = arith.addf %198, %176 : vector<8x128xf32>
    %224 = arith.minimumf %222, %223 : vector<8x128xf32>
    %225 = arith.addf %224, %66 : vector<8x128xf32>
    %226 = arith.addf %219, %106 : vector<8x128xf32>
    %227 = arith.minimumf %225, %226 : vector<8x128xf32>
    %228 = arith.addf %214, %146 : vector<8x128xf32>
    %229 = arith.minimumf %227, %228 : vector<8x128xf32>
    %230 = arith.addf %209, %186 : vector<8x128xf32>
    %231 = arith.minimumf %229, %230 : vector<8x128xf32>
    %232 = arith.addf %0, %231 : vector<8x128xf32>
    %c1_i32 = arith.constant 1 : i32
    %233 = vector.shape_cast %232 : vector<8x128xf32> to vector<1x8x128xf32>
    %cst_68 = arith.constant dense<0.000000e+00> : vector<1xf32>
    %234 = vector.multi_reduction <add>, %233, %cst_68 [1, 2] : vector<1x8x128xf32> to vector<1xf32>
    %235 = vector.shape_cast %234 : vector<1xf32> to vector<1x1x1xf32>
    %236 = vector.extract %235[0, 0, 0] : f32 from vector<1x1x1xf32>
    %c0_69 = arith.constant 0 : index
    %c0_70 = arith.constant 0 : index
    %237 = memref.load %arg2[%c0_69, %c0_70] : memref<1x1xf32, #tpu.memory_space<smem>>
    memref.store %236, %arg2[%c0_69, %c0_70] : memref<1x1xf32, #tpu.memory_space<smem>>
    return
  }
  func.func @transform_0(%arg0: i32) -> (i32, i32, i32, i32) {
    %c0_i32 = arith.constant 0 : i32
    %c0_i32_0 = arith.constant 0 : i32
    %c0_i32_1 = arith.constant 0 : i32
    %c0_i32_2 = arith.constant 0 : i32
    return %c0_i32, %c0_i32_0, %arg0, %c0_i32_1 : i32, i32, i32, i32
  }
  func.func @transform_1(%arg0: i32) -> (i32, i32) {
    %c0_i32 = arith.constant 0 : i32
    %c0_i32_0 = arith.constant 0 : i32
    return %arg0, %c0_i32 : i32, i32
  }
}

</mosaic_0001>

<llo_original>
// kernel: tpu_custom_call.1
$region0: #{tpu_custom_call.1}
  #allocation0 [shape = 'u32[]', space=smem, size = 0x4, offset = 0x4, fixed_abs, tag = 'smem constant byte address 0x4 - core index']
  #allocation1 [shape = 'u32[144,128]{1,0:T(1,128)}', space=vmem, size = 0x12000, scoped, tag = 'internal scratch']
  %s0 = inlined_call_operand.hbm [shape: f32[2,4,8,128], index: 0, kind: input, shape index: {}]
  %s1 = inlined_call_operand.hbm [shape: f32[1,1], index: 1, kind: output, shape index: {}]
  %s2 = sld [smem:[#allocation0]]
  $region18: #{tpu_custom_call.1} parent=0
    _
  %s4 = ssub.s32 1, %s2
  %s5 = scalar_select 0, %s4, %s2
  $region1: #{tpu_custom_call.1} parent=0
    #allocation2 [shape = 'u8[32768]{0}', space=vmem, size = 0x8000, scoped, tag = 'input window, operand 0, single buffered']
    #allocation3 [shape = 's32[1]{0}', space=sflag, size = 0x4, scoped, tag = 'scoped memory for tpu_custom_call.1']
    #allocation4 [shape = 's32[1]{0}', space=sflag, size = 0x4, scoped, tag = 'scoped memory for tpu_custom_call.1']
    #allocation5 [shape = 'u8[512]{0}', space=smem, size = 0x200, scoped, tag = 'output window, operand 0, single buffered']
    %6 = vsyncpa [#allocation3], 0
    %7 = vsyncpa [#allocation4], 0
    // Predicated region
    $region2: #{tpu_custom_call.1} parent=1 // pred_check
      _
    $region3: #{tpu_custom_call.1} parent=1 // pred_check_branch
      %9 = sbr.rel (0) target = $region5
    $region4: #{tpu_custom_call.1} parent=1 // pred_region
      %s11 = ssub.s32 1024, 1024
      %12 = vsyncadd [#allocation3], %s11
      %s13 = sshll.u32 [#allocation2], 4
      %s14 = int_to_ptr.vmem [resolvable:$true] %s13
      %19 = dma.hbm_to_vmem [thread:$0]  %s0, 1024, %s14, [#allocation3], 128, 128, 8
    $region5: #{tpu_custom_call.1} parent=1 // pred_fallthru
      _
    // Predicated region
    $region6: #{tpu_custom_call.1} parent=1 // pred_check
      _
    $region7: #{tpu_custom_call.1} parent=1 // pred_check_branch
      %21 = sbr.rel (0) target = $region9
    $region8: #{tpu_custom_call.1} parent=1 // pred_region
      %22 = dma.done [#allocation3], 1024
    $region9: #{tpu_custom_call.1} parent=1 // pred_fallthru
      _
    %v23 = vld [vmem:[#allocation2] sm:$0xff]
    %s24 = sadd.s32 0, 8
    %s25 = scalar_lea.vmem [#allocation2], %s24
    %v26 = vld [vmem:[%s25] sm:$0xff]
    %s27 = sadd.s32 0, 16
    %s28 = scalar_lea.vmem [#allocation2], %s27
    %v29 = vld [vmem:[%s28] sm:$0xff]
    %s30 = sadd.s32 0, 24
    %s31 = scalar_lea.vmem [#allocation2], %s30
    %v32 = vld [vmem:[%s31] sm:$0xff]
    %s33 = sadd.s32 0, 32
    %s34 = scalar_lea.vmem [#allocation2], %s33
    %v35 = vld [vmem:[%s34] sm:$0xff]
    %s36 = sadd.s32 %s24, 32
    %s37 = scalar_lea.vmem [#allocation2], %s36
    %v38 = vld [vmem:[%s37] sm:$0xff]
    %s39 = sadd.s32 %s27, 32
    %s40 = scalar_lea.vmem [#allocation2], %s39
    %v41 = vld [vmem:[%s40] sm:$0xff]
    %s42 = sadd.s32 %s30, 32
    %s43 = scalar_lea.vmem [#allocation2], %s42
    %v44 = vld [vmem:[%s43] sm:$0xff]
    %v45 = vsub.f32 %v23, %v35
    %v46 = vmul.f32 %v45, 0.31830987
    %v47 = vadd.f32 %v46, 0.5
    %v48 = vfloor.f32 %v47
    %v49 = vmul.f32 %v48, 3.1415927
    %v50 = vsub.f32 %v45, %v49
    %v51 = vmul.f32 %v50, %v50
    %v52 = vsub.f32 %v23, %v38
    %v53 = vmul.f32 %v52, 0.31830987
    %v54 = vadd.f32 %v53, 0.5
    %v55 = vfloor.f32 %v54
    %v56 = vmul.f32 %v55, 3.1415927
    %v57 = vsub.f32 %v52, %v56
    %v58 = vmul.f32 %v57, %v57
    %v59 = vsub.f32 %v23, %v41
    %v60 = vmul.f32 %v59, 0.31830987
    %v61 = vadd.f32 %v60, 0.5
    %v62 = vfloor.f32 %v61
    %v63 = vmul.f32 %v62, 3.1415927
    %v64 = vsub.f32 %v59, %v63
    %v65 = vmul.f32 %v64, %v64
    %v66 = vsub.f32 %v23, %v44
    %v67 = vmul.f32 %v66, 0.31830987
    %v68 = vadd.f32 %v67, 0.5
    %v69 = vfloor.f32 %v68
    %v70 = vmul.f32 %v69, 3.1415927
    %v71 = vsub.f32 %v66, %v70
    %v72 = vmul.f32 %v71, %v71
    %v73 = vsub.f32 %v26, %v35
    %v74 = vmul.f32 %v73, 0.31830987
    %v75 = vadd.f32 %v74, 0.5
    %v76 = vfloor.f32 %v75
    %v77 = vmul.f32 %v76, 3.1415927
    %v78 = vsub.f32 %v73, %v77
    %v79 = vmul.f32 %v78, %v78
    %v80 = vsub.f32 %v26, %v38
    %v81 = vmul.f32 %v80, 0.31830987
    %v82 = vadd.f32 %v81, 0.5
    %v83 = vfloor.f32 %v82
    %v84 = vmul.f32 %v83, 3.1415927
    %v85 = vsub.f32 %v80, %v84
    %v86 = vmul.f32 %v85, %v85
    %v87 = vsub.f32 %v26, %v41
    %v88 = vmul.f32 %v87, 0.31830987
    %v89 = vadd.f32 %v88, 0.5
    %v90 = vfloor.f32 %v89
    %v91 = vmul.f32 %v90, 3.1415927
    %v92 = vsub.f32 %v87, %v91
    %v93 = vmul.f32 %v92, %v92
    %v94 = vsub.f32 %v26, %v44
    %v95 = vmul.f32 %v94, 0.31830987
    %v96 = vadd.f32 %v95, 0.5
    %v97 = vfloor.f32 %v96
    %v98 = vmul.f32 %v97, 3.1415927
    %v99 = vsub.f32 %v94, %v98
    %v100 = vmul.f32 %v99, %v99
    %v101 = vsub.f32 %v29, %v35
    %v102 = vmul.f32 %v101, 0.31830987
    %v103 = vadd.f32 %v102, 0.5
    %v104 = vfloor.f32 %v103
    %v105 = vmul.f32 %v104, 3.1415927
    %v106 = vsub.f32 %v101, %v105
    %v107 = vmul.f32 %v106, %v106
    %v108 = vsub.f32 %v29, %v38
    %v109 = vmul.f32 %v108, 0.31830987
    %v110 = vadd.f32 %v109, 0.5
    %v111 = vfloor.f32 %v110
    %v112 = vmul.f32 %v111, 3.1415927
    %v113 = vsub.f32 %v108, %v112
    %v114 = vmul.f32 %v113, %v113
    %v115 = vsub.f32 %v29, %v41
    %v116 = vmul.f32 %v115, 0.31830987
    %v117 = vadd.f32 %v116, 0.5
    %v118 = vfloor.f32 %v117
    %v119 = vmul.f32 %v118, 3.1415927
    %v120 = vsub.f32 %v115, %v119
    %v121 = vmul.f32 %v120, %v120
    %v122 = vsub.f32 %v29, %v44
    %v123 = vmul.f32 %v122, 0.31830987
    %v124 = vadd.f32 %v123, 0.5
    %v125 = vfloor.f32 %v124
    %v126 = vmul.f32 %v125, 3.1415927
    %v127 = vsub.f32 %v122, %v126
    %v128 = vmul.f32 %v127, %v127
    %v129 = vsub.f32 %v32, %v35
    %v130 = vmul.f32 %v129, 0.31830987
    %v131 = vadd.f32 %v130, 0.5
    %v132 = vfloor.f32 %v131
    %v133 = vmul.f32 %v132, 3.1415927
    %v134 = vsub.f32 %v129, %v133
    %v135 = vmul.f32 %v134, %v134
    %v136 = vsub.f32 %v32, %v38
    %v137 = vmul.f32 %v136, 0.31830987
    %v138 = vadd.f32 %v137, 0.5
    %v139 = vfloor.f32 %v138
    %v140 = vmul.f32 %v139, 3.1415927
    %v141 = vsub.f32 %v136, %v140
    %v142 = vmul.f32 %v141, %v141
    %v143 = vsub.f32 %v32, %v41
    %v144 = vmul.f32 %v143, 0.31830987
    %v145 = vadd.f32 %v144, 0.5
    %v146 = vfloor.f32 %v145
    %v147 = vmul.f32 %v146, 3.1415927
    %v148 = vsub.f32 %v143, %v147
    %v149 = vmul.f32 %v148, %v148
    %v150 = vsub.f32 %v32, %v44
    %v151 = vmul.f32 %v150, 0.31830987
    %v152 = vadd.f32 %v151, 0.5
    %v153 = vfloor.f32 %v152
    %v154 = vmul.f32 %v153, 3.1415927
    %v155 = vsub.f32 %v150, %v154
    %v156 = vmul.f32 %v155, %v155
    %v157 = vadd.f32 %v79, %v58
    %v158 = vadd.f32 %v51, %v86
    %v159 = vmin.f32 %v157, %v158
    %v160 = vadd.f32 %v107, %v58
    %v161 = vadd.f32 %v51, %v114
    %v162 = vmin.f32 %v160, %v161
    %v163 = vadd.f32 %v135, %v58
    %v164 = vadd.f32 %v51, %v142
    %v165 = vmin.f32 %v163, %v164
    %v166 = vadd.f32 %v107, %v86
    %v167 = vadd.f32 %v79, %v114
    %v168 = vmin.f32 %v166, %v167
    %v169 = vadd.f32 %v135, %v86
    %v170 = vadd.f32 %v79, %v142
    %v171 = vmin.f32 %v169, %v170
    %v172 = vadd.f32 %v135, %v114
    %v173 = vadd.f32 %v107, %v142
    %v174 = vmin.f32 %v172, %v173
    %v175 = vadd.f32 %v168, %v65
    %v176 = vadd.f32 %v162, %v93
    %v177 = vmin.f32 %v175, %v176
    %v178 = vadd.f32 %v159, %v121
    %v179 = vmin.f32 %v177, %v178
    %v180 = vadd.f32 %v171, %v65
    %v181 = vadd.f32 %v165, %v93
    %v182 = vmin.f32 %v180, %v181
    %v183 = vadd.f32 %v159, %v149
    %v184 = vmin.f32 %v182, %v183
    %v185 = vadd.f32 %v174, %v65
    %v186 = vadd.f32 %v165, %v121
    %v187 = vmin.f32 %v185, %v186
    %v188 = vadd.f32 %v162, %v149
    %v189 = vmin.f32 %v187, %v188
    %v190 = vadd.f32 %v174, %v93
    %v191 = vadd.f32 %v171, %v121
    %v192 = vmin.f32 %v190, %v191
    %v193 = vadd.f32 %v168, %v149
    %v194 = vmin.f32 %v192, %v193
    %v195 = vadd.f32 %v194, %v72
    %v196 = vadd.f32 %v189, %v100
    %v197 = vmin.f32 %v195, %v196
    %v198 = vadd.f32 %v184, %v128
    %v199 = vmin.f32 %v197, %v198
    %v200 = vadd.f32 %v179, %v156
    %v201 = vmin.f32 %v199, %v200
    %v202 = vadd.f32 %v201, 0.0
    %203 = vadd.xlane.f32.xlu0 %v202
    %v204 = vpop.xlane.xlu0 %203
    %v205 = vrot.slane %v204, 4
    %v206 = vadd.f32 %v204, %v205
    %v207 = vrot.slane %v206, 2
    %v208 = vadd.f32 %v206, %v207
    %v209 = vrot.slane %v208, 1
    %v210 = vadd.f32 %v208, %v209
    %s211 = vtos %v210
    %s212 = scalar_lea.smem [#allocation5], 0
    %213 = sst [smem:[%s212]] %s211
    // Predicated region
    $region10: #{tpu_custom_call.1} parent=1 // pred_check
      _
    $region11: #{tpu_custom_call.1} parent=1 // pred_check_branch
      %215 = sbr.rel (0) target = $region13
    $region12: #{tpu_custom_call.1} parent=1 // pred_region
      %s217 = ssub.s32 16, 16
      %218 = vsyncadd [#allocation4], %s217
      %221 = dma.smem_to_hbm [#allocation5], 16, %s1, [#allocation4]
    $region13: #{tpu_custom_call.1} parent=1 // pred_fallthru
      _
    // Predicated region
    $region14: #{tpu_custom_call.1} parent=1 // pred_check
      _
    $region15: #{tpu_custom_call.1} parent=1 // pred_check_branch
      %223 = sbr.rel (0) target = $region17
    $region16: #{tpu_custom_call.1} parent=1 // pred_region
      %224 = dma.done [#allocation4], 16
    $region17: #{tpu_custom_call.1} parent=1 // pred_fallthru
      _
    %225 = sfence
    %226 = vsyncpa [#allocation3], 1
    %227 = vsyncpa [#allocation4], 1

</llo_original>
